<compile_context>
chip_gen: v7x
topology: tpu7x:2x2x1
jax: 0.10.0
libtpu: 0.0.40
codegen_flags: <defaults>
</compile_context>

<pallas_src>
import math

import jax
import jax.numpy as jnp
import numpy as np
from jax.experimental import pallas as pl
from jax.experimental.pallas import tpu as pltpu


# --------------------------------------------------------------------------
# Host-side parameter construction (deterministic, from __init__ arguments).
# --------------------------------------------------------------------------
def _scales_and_weights(max_downsample=8, steps_to_downsample=4):
    md, steps = max_downsample, steps_to_downsample
    scales = [md ** (step / (steps - 1)) for step in range(steps)]
    weights_r = [np.exp(-step) for step in range(steps)]
    wsum = sum(weights_r)
    weights = [w / wsum for w in weights_r]
    return scales, weights


def _bilinear_resize_matrix(in_size, out_size, scale):
    """(out_size, in_size) matrix reproducing torch bilinear resize along one
    axis (align_corners=False, explicit scale_factor => ratio = 1/scale)."""
    ratio = 1.0 / float(scale)
    m = np.zeros((out_size, in_size), dtype=np.float64)
    for j in range(out_size):
        src = (j + 0.5) * ratio - 0.5
        if src < 0.0:
            src = 0.0
        x0 = int(np.floor(src))
        x0 = min(max(x0, 0), in_size - 1)
        x1 = min(x0 + 1, in_size - 1)
        lam = src - x0
        m[j, x0] += 1.0 - lam
        m[j, x1] += lam
    return m


def _stencil_matrices(n):
    """Averaging A (n-1, n) and forward-difference D (n-1, n) matrices."""
    a = np.zeros((n - 1, n), dtype=np.float64)
    d = np.zeros((n - 1, n), dtype=np.float64)
    idx = np.arange(n - 1)
    a[idx, idx] = 0.5
    a[idx, idx + 1] = 0.5
    d[idx, idx] = -1.0
    d[idx, idx + 1] = 1.0
    return a, d


def _gram_factors(h, w, max_downsample, steps_to_downsample, bc):
    """P_stack (K*H, H) f32 with loss weight + MSE denominator folded in, and
    Q_cat (W, K*Wp) f32 (cast to bf16 at the call site), each Q_k lane-padded
    with zero columns to Wp = ceil(W/128)*128.  K = 2 * steps."""
    scales, weights = _scales_and_weights(max_downsample, steps_to_downsample)
    wp = -(-w // 128) * 128
    p_blocks, q_blocks = [], []
    for scale, lw in zip(scales, weights):
        ho = int(math.floor(h * scale))
        wo = int(math.floor(w * scale))
        assert ho >= 2 and wo >= 2, "image too small for this scale"
        wh = _bilinear_resize_matrix(h, ho, scale)     # (Ho, H)
        ww = _bilinear_resize_matrix(w, wo, scale)     # (Wo, W)
        a_h, d_h = _stencil_matrices(ho)
        a_w, d_w = _stencil_matrices(wo)
        coef = lw / float(bc * (ho - 1) * (wo - 1))    # MSE mean denominator
        # horizontal gradient: diff_w = (A_h Wh) d (D_w Ww)^T
        # vertical   gradient: diff_h = (D_h Wh) d (A_w Ww)^T
        for m1, m2 in ((a_h @ wh, d_w @ ww), (d_h @ wh, a_w @ ww)):
            p = coef * (m1.T @ m1)
            q = m2.T @ m2
            p = 0.5 * (p + p.T)
            q = 0.5 * (q + q.T)
            q_pad = np.zeros((w, wp), dtype=np.float64)
            q_pad[:, :w] = q
            p_blocks.append(p)
            q_blocks.append(q_pad)
    p_stack = np.concatenate(p_blocks, axis=0).astype(np.float32)   # (K*H, H)
    q_cat = np.concatenate(q_blocks, axis=1).astype(np.float32)     # (W, K*Wp)
    return p_stack, q_cat, wp


# --------------------------------------------------------------------------
# Pallas kernel: one grid step handles TILE_BC residual images and all
# (scale, direction) terms via two big MXU contractions; emits a lane-vector
# partial sum.
# --------------------------------------------------------------------------
def _msgl_kernel(inf_ref, tgt_ref, p_ref, q_ref, out_ref):
    t, h, w = inf_ref.shape
    n_terms = p_ref.shape[0] // h
    wp = q_ref.shape[1] // n_terms

    # residual in f32 (resize & stencil are linear => work on the difference);
    # bf16 MXU operands, f32 accumulation.
    d = inf_ref[...].astype(jnp.float32) - tgt_ref[...].astype(jnp.float32)
    d_bf = d.astype(jnp.bfloat16)                                  # (T, H, W)

    # 1) all K (scale, direction) Gram factors fused into ONE matmul:
    #    (T*H, W) @ (W, K*Wp) -> (T*H, K*Wp)
    r_all = jnp.dot(d_bf.reshape(t * h, w), q_ref[...],
                    preferred_element_type=jnp.float32)
    r_bf = r_all.astype(jnp.bfloat16)

    # 2) regroup the K lane blocks (Wp % 128 == 0, so every slice is lane-tile
    #    aligned) so K folds into the M dim of the per-image Gram contraction:
    #    stacked[b, kk*H + i, :] = (d_b @ Q_kk)[i, :]
    stacked = jnp.concatenate(
        [r_bf[:, kk * wp:(kk + 1) * wp].reshape(t, h, wp)
         for kk in range(n_terms)], axis=1)                        # (T, K*H, Wp)

    # zero-pad residual lanes to Wp (padded Q columns are zero => padded terms
    # contribute nothing)
    if wp != w:
        d_pad = jnp.concatenate(
            [d_bf, jnp.zeros((t, h, wp - w), dtype=jnp.bfloat16)], axis=-1)
    else:
        d_pad = d_bf

    # 3) batched Gram contraction, one (K*H, Wp) @ (Wp, H) matmul per image:
    #    s[b, kk*H + i, j] = sum_w (d_b Q_kk)[i, w] * d_b[j, w]
    s = jnp.einsum('bmw,bjw->bmj', stacked, d_pad,
                   preferred_element_type=jnp.float32)             # (T, K*H, H)

    # loss weights and MSE denominators are folded into P; defer the final
    # reduction to the wrapper: write a (1, 1, H) lane vector partial sum.
    acc = p_ref[...] * jnp.sum(s, axis=0)                          # (K*H, H)
    out_ref[...] = jnp.sum(acc, axis=0).reshape(1, 1, h)


# --------------------------------------------------------------------------
# Module forward.
# --------------------------------------------------------------------------
def multi_scale_gradient_loss(inferred_image, target_image,
                              max_downsample=8, steps_to_downsample=4,
                              tile_bc=None):
    b, c, h, w = inferred_image.shape
    bc = b * c

    p_np, q_np, wp = _gram_factors(h, w, max_downsample, steps_to_downsample, bc)
    n_terms = 2 * steps_to_downsample
    kh = n_terms * h
    kwp = n_terms * wp
    in_itemsize = jnp.dtype(inferred_image.dtype).itemsize

    try:
        vmem_cap = pltpu.get_tpu_info().vmem_capacity_bytes
    except Exception:
        vmem_cap = 64 * 1024 * 1024        # conservative fallback (v7x physical)

    def _est(t):
        return (2 * 2 * t * h * w * in_itemsize      # inputs, double-buffered
                + kh * h * 4 + w * kwp * 2           # P f32 + Q bf16, Buffered(1)
                + t * h * w * 6                      # d f32 + bf16
                + t * h * wp * 2                     # d_pad bf16
                + t * h * kwp * 6                    # r_all f32 + bf16
                + t * kh * wp * 2                    # stacked bf16
                + t * kh * h * 4                     # s f32
                + 2 * kh * h * 4)                    # acc + elementwise temp

    budget = int(0.5 * vmem_cap)
    pad_batch = False
    if tile_bc is None:
        target = max(1, min(512 // max(h, 1), bc))   # ~two 256-row MXU M tiles
        if bc >= 2:
            target = max(1, min(target, bc // 2))    # keep >=2 blocks (v7x: 2 TCs)
        while target > 1 and _est(target) > budget:
            target -= 1
        tile = target
        while tile > 1 and bc % tile:                # divisor => no remainder pad
            tile -= 1
        if tile < max(1, target // 2):               # rare (e.g. prime bc): pad
            tile, pad_batch = target, True
        tile_bc = tile
    else:
        tile_bc = max(1, min(int(tile_bc), bc))
        pad_batch = (bc % tile_bc) != 0

    inf2 = inferred_image.reshape(bc, h, w)          # native dtype, cast in-kernel
    tgt2 = target_image.reshape(bc, h, w)
    if pad_batch:
        # zero residual rows contribute zero loss; the MSE denominator (bc) is
        # already baked into P from the UNPADDED batch.
        pad = tile_bc - (bc % tile_bc)
        zpad = jnp.zeros((pad, h, w), dtype=inf2.dtype)
        inf2 = jnp.concatenate([inf2, zpad], axis=0)
        tgt2 = jnp.concatenate([tgt2, zpad], axis=0)
    n_blocks = inf2.shape[0] // tile_bc

    p_arr = jnp.asarray(p_np)                          # (K*H, H)   f32
    q_arr = jnp.asarray(q_np, dtype=jnp.bfloat16)      # (W, K*Wp)  bf16

    est = _est(tile_bc)
    if est > 12 * 1024 * 1024:
        vmem_limit = min(max(int(est * 1.5), 16 * 1024 * 1024),
                         int(0.75 * vmem_cap))
        compiler_params = pltpu.CompilerParams(
            dimension_semantics=("parallel",), vmem_limit_bytes=vmem_limit)
    else:
        compiler_params = pltpu.CompilerParams(
            dimension_semantics=("parallel",))

    partials = pl.pallas_call(
        _msgl_kernel,
        out_shape=jax.ShapeDtypeStruct((n_blocks, 1, h), jnp.float32),
        grid_spec=pltpu.PrefetchScalarGridSpec(
            num_scalar_prefetch=0,
            grid=(n_blocks,),
            in_specs=[
                pl.BlockSpec((tile_bc, h, w), lambda i: (i, 0, 0)),
                pl.BlockSpec((tile_bc, h, w), lambda i: (i, 0, 0)),
                pl.BlockSpec((kh, h), lambda i: (0, 0),
                             pipeline_mode=pl.Buffered(1)),
                pl.BlockSpec((w, kwp), lambda i: (0, 0),
                             pipeline_mode=pl.Buffered(1)),
            ],
            out_specs=pl.BlockSpec((1, 1, h), lambda i: (i, 0, 0)),
        ),
        compiler_params=compiler_params,
    )(inf2, tgt2, p_arr, q_arr)

    return jnp.sum(partials)


# --------------------------------------------------------------------------
# Pure-JAX reference (direct resize + stencil on BOTH images, no Pallas and no
# Gram/linearity rewrites) for a sanity check.
# --------------------------------------------------------------------------
def _reference_loss(inferred_image, target_image,
                    max_downsample=8, steps_to_downsample=4):
    b, c, h, w = inferred_image.shape
    scales, weights = _scales_and_weights(max_downsample, steps_to_downsample)
    inf3 = inferred_image.reshape(b * c, h, w).astype(jnp.float32)
    tgt3 = target_image.reshape(b * c, h, w).astype(jnp.float32)

    def grads(img, wh, ww):
        up = jnp.einsum('oh,bhw,pw->bop', wh, img, ww)
        tl = up[:, :-1, :-1]
        tr = up[:, :-1, 1:]
        bl = up[:, 1:, :-1]
        br = up[:, 1:, 1:]
        dw = 0.5 * ((tr - tl) + (br - bl))
        dh = 0.5 * ((bl - tl) + (br - tr))
        return dw, dh

    total = jnp.float32(0.0)
    for scale, lw in zip(scales, weights):
        ho = int(math.floor(h * scale))
        wo = int(math.floor(w * scale))
        wh = jnp.asarray(_bilinear_resize_matrix(h, ho, scale).astype(np.float32))
        ww = jnp.asarray(_bilinear_resize_matrix(w, wo, scale).astype(np.float32))
        iw, ih = grads(inf3, wh, ww)
        tw, th = grads(tgt3, wh, ww)
        total = total + jnp.float32(lw) * (jnp.mean((iw - tw) ** 2)
                                           + jnp.mean((ih - th) ** 2))
    return total


if __name__ == "__main__":
    key = jax.random.PRNGKey(0)
    k1, k2 = jax.random.split(key)
    inferred = jax.random.normal(k1, (2, 4, 16, 16), dtype=jnp.float32)
    target = jax.random.normal(k2, (2, 4, 16, 16), dtype=jnp.float32)

    loss = jax.block_until_ready(multi_scale_gradient_loss(inferred, target))
    ref = jax.block_until_ready(_reference_loss(inferred, target))

    assert bool(jnp.isfinite(loss)), "loss is not finite"
    # bf16 MXU operands + Gram/trace reformulation => loose-ish tolerance
    assert bool(jnp.allclose(loss, ref, rtol=3e-2, atol=1e-4)), (loss, ref)

    print("KERNEL_OK")
</pallas_src>

<mosaic_0001>
module attributes {stable_mosaic.version = 11 : i64} {
  func.func @_msgl_kernel(%arg0: i32, %arg1: memref<4x16x16xf32, #tpu.memory_space<vmem>>, %arg2: memref<4x16x16xf32, #tpu.memory_space<vmem>>, %arg3: memref<128x16xf32, #tpu.memory_space<vmem>>, %arg4: memref<16x1024xbf16, #tpu.memory_space<vmem>>, %arg5: memref<1x1x16xf32, #tpu.memory_space<vmem>>) attributes {dimension_semantics = [#tpu.dimension_semantics<parallel>], iteration_bounds = array<i64: 2>, scalar_prefetch = 0 : i64, scratch_operands = 0 : i64, tpu.core_type = #tpu.core_type<tc>, window_params = [{transform_indices = @transform_0, window_bounds = array<i64: 4, 16, 16>}, {transform_indices = @transform_1, window_bounds = array<i64: 4, 16, 16>}, {pipeline_mode = #tpu.pipeline_mode<synchronous>, transform_indices = @transform_2, window_bounds = array<i64: 128, 16>}, {pipeline_mode = #tpu.pipeline_mode<synchronous>, transform_indices = @transform_3, window_bounds = array<i64: 16, 1024>}, {transform_indices = @transform_4, window_bounds = array<i64: 1, 1, 16>}]} {
    %c0 = arith.constant 0 : index
    %c0_0 = arith.constant 0 : index
    %c0_1 = arith.constant 0 : index
    %0 = vector.load %arg1[%c0, %c0_0, %c0_1] : memref<4x16x16xf32, #tpu.memory_space<vmem>>, vector<4x16x16xf32>
    %c0_2 = arith.constant 0 : index
    %c0_3 = arith.constant 0 : index
    %c0_4 = arith.constant 0 : index
    %1 = vector.load %arg2[%c0_2, %c0_3, %c0_4] : memref<4x16x16xf32, #tpu.memory_space<vmem>>, vector<4x16x16xf32>
    %2 = arith.subf %0, %1 : vector<4x16x16xf32>
    %3 = arith.truncf %2 : vector<4x16x16xf32> to vector<4x16x16xbf16>
    %4 = vector.shape_cast %3 : vector<4x16x16xbf16> to vector<64x16xbf16>
    %c0_5 = arith.constant 0 : index
    %c0_6 = arith.constant 0 : index
    %5 = vector.load %arg4[%c0_5, %c0_6] : memref<16x1024xbf16, #tpu.memory_space<vmem>>, vector<16x1024xbf16>
    %cst = arith.constant dense<0.000000e+00> : vector<64x1024xf32>
    %6 = tpu.matmul %4, %5, %cst {dimension_numbers = #tpu.dot_dimension_numbers<[1], [0], [0], [1], [0, 0, 1, 1], [], []>} : vector<64x16xbf16>, vector<16x1024xbf16>, vector<64x1024xf32> -> vector<64x1024xf32>
    %7 = arith.truncf %6 : vector<64x1024xf32> to vector<64x1024xbf16>
    %8 = vector.extract_strided_slice %7 {offsets = [0, 0], sizes = [64, 128], strides = [1, 1]} : vector<64x1024xbf16> to vector<64x128xbf16>
    %9 = vector.shape_cast %8 : vector<64x128xbf16> to vector<4x16x128xbf16>
    %10 = vector.extract_strided_slice %7 {offsets = [0, 128], sizes = [64, 128], strides = [1, 1]} : vector<64x1024xbf16> to vector<64x128xbf16>
    %11 = vector.shape_cast %10 : vector<64x128xbf16> to vector<4x16x128xbf16>
    %12 = vector.extract_strided_slice %7 {offsets = [0, 256], sizes = [64, 128], strides = [1, 1]} : vector<64x1024xbf16> to vector<64x128xbf16>
    %13 = vector.shape_cast %12 : vector<64x128xbf16> to vector<4x16x128xbf16>
    %14 = vector.extract_strided_slice %7 {offsets = [0, 384], sizes = [64, 128], strides = [1, 1]} : vector<64x1024xbf16> to vector<64x128xbf16>
    %15 = vector.shape_cast %14 : vector<64x128xbf16> to vector<4x16x128xbf16>
    %16 = vector.extract_strided_slice %7 {offsets = [0, 512], sizes = [64, 128], strides = [1, 1]} : vector<64x1024xbf16> to vector<64x128xbf16>
    %17 = vector.shape_cast %16 : vector<64x128xbf16> to vector<4x16x128xbf16>
    %18 = vector.extract_strided_slice %7 {offsets = [0, 640], sizes = [64, 128], strides = [1, 1]} : vector<64x1024xbf16> to vector<64x128xbf16>
    %19 = vector.shape_cast %18 : vector<64x128xbf16> to vector<4x16x128xbf16>
    %20 = vector.extract_strided_slice %7 {offsets = [0, 768], sizes = [64, 128], strides = [1, 1]} : vector<64x1024xbf16> to vector<64x128xbf16>
    %21 = vector.shape_cast %20 : vector<64x128xbf16> to vector<4x16x128xbf16>
    %22 = vector.extract_strided_slice %7 {offsets = [0, 896], sizes = [64, 128], strides = [1, 1]} : vector<64x1024xbf16> to vector<64x128xbf16>
    %23 = vector.shape_cast %22 : vector<64x128xbf16> to vector<4x16x128xbf16>
    %24 = tpu.concatenate %9, %11, %13, %15, %17, %19, %21, %23 in 1 : vector<4x16x128xbf16>, vector<4x16x128xbf16>, vector<4x16x128xbf16>, vector<4x16x128xbf16>, vector<4x16x128xbf16>, vector<4x16x128xbf16>, vector<4x16x128xbf16>, vector<4x16x128xbf16> -> vector<4x128x128xbf16>
    %cst_7 = arith.constant 0.000000e+00 : bf16
    %25 = vector.broadcast %cst_7 : bf16 to vector<4x16x112xbf16>
    %26 = tpu.concatenate %3, %25 in 2 : vector<4x16x16xbf16>, vector<4x16x112xbf16> -> vector<4x16x128xbf16>
    "tpu.trace_start"() <{level = 10 : i32, message = "bmw,bjw->bmj"}> : () -> ()
    %cst_8 = arith.constant dense<0.000000e+00> : vector<4x128x16xf32>
    %27 = tpu.matmul %24, %26, %cst_8 {dimension_numbers = #tpu.dot_dimension_numbers<[2], [2], [1], [1], [0, 0, 0, 1, 1, 1], [0], [0]>} : vector<4x128x128xbf16>, vector<4x16x128xbf16>, vector<4x128x16xf32> -> vector<4x128x16xf32>
    "tpu.trace_stop"() : () -> ()
    %c0_9 = arith.constant 0 : index
    %c0_10 = arith.constant 0 : index
    %28 = vector.load %arg3[%c0_9, %c0_10] : memref<128x16xf32, #tpu.memory_space<vmem>>, vector<128x16xf32>
    %cst_11 = arith.constant dense<0.000000e+00> : vector<128x16xf32>
    %29 = vector.multi_reduction <add>, %27, %cst_11 [0] : vector<4x128x16xf32> to vector<128x16xf32>
    %30 = arith.mulf %28, %29 : vector<128x16xf32>
    %cst_12 = arith.constant dense<0.000000e+00> : vector<16xf32>
    %31 = vector.multi_reduction <add>, %30, %cst_12 [0] : vector<128x16xf32> to vector<16xf32>
    %32 = vector.shape_cast %31 : vector<16xf32> to vector<1x1x16xf32>
    %c0_13 = arith.constant 0 : index
    %c0_14 = arith.constant 0 : index
    %c0_15 = arith.constant 0 : index
    %33 = vector.load %arg5[%c0_13, %c0_14, %c0_15] : memref<1x1x16xf32, #tpu.memory_space<vmem>>, vector<1x1x16xf32>
    tpu.vector_store %arg5[%c0_13, %c0_14, %c0_15], %32 {strides = array<i32>} : memref<1x1x16xf32, #tpu.memory_space<vmem>>, vector<1x1x16xf32>,
    return
  }
  func.func @transform_0(%arg0: i32) -> (i32, i32, i32) {
    %c0_i32 = arith.constant 0 : i32
    %c0_i32_0 = arith.constant 0 : i32
    %c0_i32_1 = arith.constant 0 : i32
    return %arg0, %c0_i32, %c0_i32_0 : i32, i32, i32
  }
  func.func @transform_1(%arg0: i32) -> (i32, i32, i32) {
    %c0_i32 = arith.constant 0 : i32
    %c0_i32_0 = arith.constant 0 : i32
    %c0_i32_1 = arith.constant 0 : i32
    return %arg0, %c0_i32, %c0_i32_0 : i32, i32, i32
  }
  func.func @transform_2(%arg0: i32) -> (i32, i32) {
    %c0_i32 = arith.constant 0 : i32
    %c0_i32_0 = arith.constant 0 : i32
    %c0_i32_1 = arith.constant 0 : i32
    return %c0_i32, %c0_i32_0 : i32, i32
  }
  func.func @transform_3(%arg0: i32) -> (i32, i32) {
    %c0_i32 = arith.constant 0 : i32
    %c0_i32_0 = arith.constant 0 : i32
    %c0_i32_1 = arith.constant 0 : i32
    return %c0_i32, %c0_i32_0 : i32, i32
  }
  func.func @transform_4(%arg0: i32) -> (i32, i32, i32) {
    %c0_i32 = arith.constant 0 : i32
    %c0_i32_0 = arith.constant 0 : i32
    %c0_i32_1 = arith.constant 0 : i32
    return %arg0, %c0_i32, %c0_i32_0 : i32, i32, i32
  }
}

</mosaic_0001>

<llo_original>
// kernel: tpu_custom_call.1
$region0: #{tpu_custom_call.1}
  #allocation0 [shape = 'u32[]', space=smem, size = 0x4, offset = 0x4, fixed_abs, tag = 'smem constant byte address 0x4 - core index']
  #allocation1 [shape = 'u32[144,128]{1,0:T(1,128)}', space=vmem, size = 0x12000, scoped, tag = 'internal scratch']
  %s0 = inlined_call_operand.vmem [shape: f32[8,16,16], index: 0, kind: input, shape index: {}]
  %s1 = inlined_call_operand.hbm [shape: f32[8,16,16], index: 1, kind: input, shape index: {}]
  %s2 = inlined_call_operand.vmem [shape: f32[128,16], index: 2, kind: input, shape index: {}]
  %s3 = inlined_call_operand.hbm [shape: bf16[16,1024], index: 3, kind: input, shape index: {}]
  %s4 = inlined_call_operand.hbm [shape: f32[2,1,16], index: 4, kind: output, shape index: {}]
  %s5 = sld [smem:[#allocation0]]
  $region57: #{tpu_custom_call.1} parent=0
    _
  %s7 = ssub.s32 1, %s5
  %s8 = scalar_select 0, %s7, %s5
  $region1: #{tpu_custom_call.1} parent=0
    #allocation2 [shape = 'u8[65536]{0}', space=vmem, size = 0x10000, scoped, tag = 'input window, operand 1']
    #allocation3 [shape = 's32[2]{0}', space=sflag, size = 0x8, scoped, tag = 'scoped memory for tpu_custom_call.1']
    #allocation4 [shape = 's32[2]{0}', space=sflag, size = 0x8, scoped, tag = 'scoped memory for tpu_custom_call.1']
    #allocation5 [shape = 'u8[32768]{0}', space=vmem, size = 0x8000, scoped, tag = 'input window, operand 3, single buffered']
    #allocation6 [shape = 's32[1]{0}', space=sflag, size = 0x4, scoped, tag = 'scoped memory for tpu_custom_call.1']
    #allocation7 [shape = 'u8[1024]{0}', space=vmem, size = 0x400, scoped, tag = 'output window, operand 0']
    %9 = vsyncpa [#allocation3], 0
    %s10 = scalar_lea.sflag [#allocation3], 1
    %11 = vsyncpa %s10, 0
    %12 = vsyncpa [#allocation6], 0
    %13 = vsyncpa [#allocation4], 0
    %s14 = scalar_lea.sflag [#allocation4], 1
    %15 = vsyncpa %s14, 0
    loop: start=0, step=1, limit=4
    $region2: #{tpu_custom_call.1} parent=1 // loop_pre_header
      _
    $region3: #{tpu_custom_call.1} parent=1 // loop_header
      %s17 = sphi 0, %s21
      %p18 = scmp.ge.s32.totalorder %s17, 4
      %s27 = sphi 0, %s29
      %s30 = sphi 0, %s27
      %s31 = sphi 0, %s30
      %s47 = sphi 0, %s31
      %s53 = sphi 0, %s55
      %s56 = sphi 0, %s53
      %s57 = sphi 0, %s56
      %s73 = sphi 0, %s57
      %s77 = sphi 0, %s77
      %s79 = sphi 0, %s77
      %s80 = sphi 0, %s79
      %s94 = sphi 0, %s80
      %s98 = sphi 0, %s98
      %s100 = sphi 0, %s98
      %s101 = sphi 0, %s100
      %s115 = sphi 0, %s101
      %s121 = sphi 0, %s123
      %s124 = sphi 0, %s121
      %s125 = sphi 0, %s124
      %s141 = sphi 0, %s125
    $region4: #{tpu_custom_call.1} parent=1 // loop_header_branch
      %20 = sbr.rel (%p18) target = $region8
    $region5: #{tpu_custom_call.1} parent=1 // loop_body
      %s22 = ssub.s32 %s17, 1
      %s23 = ssub.s32 %s17, 2
      %s24 = sadd.s32 %s17, 1
      %s25 = ssub.s32 %s17, %s24
      %p26 = scmp.eq.s32.totalorder %s25, 0
      %s28 = sadd.s32 %s27, 1
      %s29 = scalar_select %p26, %s27, %s28
      %p32 = pneg %p26
      %p33 = scmp.eq.s32.totalorder %s17, 1
      %p34 = por %p32, %p33
      %p35 = scmp.ne.s32.totalorder %s27, %s30
      %p36 = scmp.eq.s32.totalorder %s17, 0
      %p37 = por %p35, %p36
      %p38 = scmp.ne.s32.totalorder %s27, %s30
      %p39 = scmp.eq.s32.totalorder %s22, 1
      %p40 = por %p38, %p39
      %p41 = scmp.ne.s32.totalorder %s30, %s31
      %p42 = scmp.eq.s32.totalorder %s22, 0
      %p43 = por %p41, %p42
      %p44 = scmp.ne.s32.totalorder %s30, %s31
      %p45 = scmp.eq.s32.totalorder %s23, 1
      %p46 = por %p44, %p45
      %p48 = scmp.ne.s32.totalorder %s31, %s47
      %p49 = scmp.eq.s32.totalorder %s23, 0
      %p50 = por %p48, %p49
      %s51 = ssub.s32 %s17, %s24
      %p52 = scmp.eq.s32.totalorder %s51, 0
      %s54 = sadd.s32 %s53, 1
      %s55 = scalar_select %p52, %s53, %s54
      %p58 = pneg %p52
      %p59 = scmp.eq.s32.totalorder %s17, 1
      %p60 = por %p58, %p59
      %p61 = scmp.ne.s32.totalorder %s53, %s56
      %p62 = scmp.eq.s32.totalorder %s17, 0
      %p63 = por %p61, %p62
      %p64 = scmp.ne.s32.totalorder %s53, %s56
      %p65 = scmp.eq.s32.totalorder %s22, 1
      %p66 = por %p64, %p65
      %p67 = scmp.ne.s32.totalorder %s56, %s57
      %p68 = scmp.eq.s32.totalorder %s22, 0
      %p69 = por %p67, %p68
      %p70 = scmp.ne.s32.totalorder %s56, %s57
      %p71 = scmp.eq.s32.totalorder %s23, 1
      %p72 = por %p70, %p71
      %p74 = scmp.ne.s32.totalorder %s57, %s73
      %p75 = scmp.eq.s32.totalorder %s23, 0
      %p76 = por %p74, %p75
      %s78 = sadd.s32 %s77, 1
      %p81 = scmp.eq.s32.totalorder %s17, 1
      %p82 = scmp.ne.s32.totalorder %s77, %s79
      %p83 = scmp.eq.s32.totalorder %s17, 0
      %p84 = por %p82, %p83
      %p85 = scmp.ne.s32.totalorder %s77, %s79
      %p86 = scmp.eq.s32.totalorder %s22, 1
      %p87 = por %p85, %p86
      %p88 = scmp.ne.s32.totalorder %s79, %s80
      %p89 = scmp.eq.s32.totalorder %s22, 0
      %p90 = por %p88, %p89
      %p91 = scmp.ne.s32.totalorder %s79, %s80
      %p92 = scmp.eq.s32.totalorder %s23, 1
      %p93 = por %p91, %p92
      %p95 = scmp.ne.s32.totalorder %s80, %s94
      %p96 = scmp.eq.s32.totalorder %s23, 0
      %p97 = por %p95, %p96
      %s99 = sadd.s32 %s98, 1
      %p102 = scmp.eq.s32.totalorder %s17, 1
      %p103 = scmp.ne.s32.totalorder %s98, %s100
      %p104 = scmp.eq.s32.totalorder %s17, 0
      %p105 = por %p103, %p104
      %p106 = scmp.ne.s32.totalorder %s98, %s100
      %p107 = scmp.eq.s32.totalorder %s22, 1
      %p108 = por %p106, %p107
      %p109 = scmp.ne.s32.totalorder %s100, %s101
      %p110 = scmp.eq.s32.totalorder %s22, 0
      %p111 = por %p109, %p110
      %p112 = scmp.ne.s32.totalorder %s100, %s101
      %p113 = scmp.eq.s32.totalorder %s23, 1
      %p114 = por %p112, %p113
      %p116 = scmp.ne.s32.totalorder %s101, %s115
      %p117 = scmp.eq.s32.totalorder %s23, 0
      %p118 = por %p116, %p117
      %s119 = ssub.s32 %s17, %s24
      %p120 = scmp.eq.s32.totalorder %s119, 0
      %s122 = sadd.s32 %s121, 1
      %s123 = scalar_select %p120, %s121, %s122
      %p126 = pneg %p120
      %p127 = scmp.eq.s32.totalorder %s17, 1
      %p128 = por %p126, %p127
      %p129 = scmp.ne.s32.totalorder %s121, %s124
      %p130 = scmp.eq.s32.totalorder %s17, 0
      %p131 = por %p129, %p130
      %p132 = scmp.ne.s32.totalorder %s121, %s124
      %p133 = scmp.eq.s32.totalorder %s22, 1
      %p134 = por %p132, %p133
      %p135 = scmp.ne.s32.totalorder %s124, %s125
      %p136 = scmp.eq.s32.totalorder %s22, 0
      %p137 = por %p135, %p136
      %p138 = scmp.ne.s32.totalorder %s124, %s125
      %p139 = scmp.eq.s32.totalorder %s23, 1
      %p140 = por %p138, %p139
      %p142 = scmp.ne.s32.totalorder %s125, %s141
      %p143 = scmp.eq.s32.totalorder %s23, 0
      %p144 = por %p142, %p143
      %p145 = scmp.le.s32.totalorder 1, %s17
      %p146 = scmp.lt.s32.totalorder %s17, 3
      %p147 = pnand %p145, %p146
      %p148 = pneg %p147
      // Predicated region
      $region9: #{tpu_custom_call.1} parent=5 // pred_check
        _
      $region10: #{tpu_custom_call.1} parent=5 // pred_check_branch
        %150 = sbr.rel (%p147) target = $region12
      $region11: #{tpu_custom_call.1} parent=5 // pred_region
        %s151 = ssub.s32 %s17, 1
        // Predicated region
        $region13: #{tpu_custom_call.1} parent=11 // pred_check
          %p152 = pneg %p90
        $region14: #{tpu_custom_call.1} parent=11 // pred_check_branch
          %154 = sbr.rel (%p152) target = $region16
        $region15: #{tpu_custom_call.1} parent=11 // pred_region
          _
        $region16: #{tpu_custom_call.1} parent=11 // pred_fallthru
          _
        // Predicated region
        $region17: #{tpu_custom_call.1} parent=11 // pred_check
          %p155 = pneg %p111
        $region18: #{tpu_custom_call.1} parent=11 // pred_check_branch
          %157 = sbr.rel (%p155) target = $region20
        $region19: #{tpu_custom_call.1} parent=11 // pred_region
          %s159 = ssub.s32 1024, 1024
          %160 = vsyncadd [#allocation6], %s159
          %s161 = sshll.u32 [#allocation5], 4
          %s162 = int_to_ptr.vmem [resolvable:$true] %s161
          %167 = dma.hbm_to_vmem [thread:$0]  %s3, 1024, %s162, [#allocation6], 512, 512, 32
        $region20: #{tpu_custom_call.1} parent=11 // pred_fallthru
          _
      $region12: #{tpu_custom_call.1} parent=5 // pred_fallthru
        _
      %p168 = scmp.lt.s32.totalorder %s17, 2
      // Predicated region
      $region21: #{tpu_custom_call.1} parent=5 // pred_check
        %p169 = pneg %p168
      $region22: #{tpu_custom_call.1} parent=5 // pred_check_branch
        %171 = sbr.rel (%p169) target = $region24
      $region23: #{tpu_custom_call.1} parent=5 // pred_region
        // Predicated region
        $region25: #{tpu_custom_call.1} parent=23 // pred_check
          %p172 = pneg %p37
        $region26: #{tpu_custom_call.1} parent=23 // pred_check_branch
          %174 = sbr.rel (%p172) target = $region28
        $region27: #{tpu_custom_call.1} parent=23 // pred_region
          %s175 = smul.u32 4, %s17
          %p176 = scmp.lt.s32.totalorder %s175, 7
          %s177 = scalar_select %p176, %s175, 7
          %s178 = smul.addr %s177, 2
          %s179 = smul.addr %s178, 8
          %s180 = scalar_lea.vmem %s0, %s179
          %s181 = smul.u32 4, %s17
        $region28: #{tpu_custom_call.1} parent=23 // pred_fallthru
          _
        // Predicated region
        $region29: #{tpu_custom_call.1} parent=23 // pred_check
          %p182 = pneg %p63
        $region30: #{tpu_custom_call.1} parent=23 // pred_check_branch
          %184 = sbr.rel (%p182) target = $region32
        $region31: #{tpu_custom_call.1} parent=23 // pred_region
          %s185 = sand.u32 %s53, 1
          %s186 = scalar_lea.sflag [#allocation3], %s185
          %s187 = sand.u32 %s53, 1
          %s188 = smul.addr %s187, 64
          %s189 = scalar_lea.vmem [#allocation2], %s188
          %s190 = smul.u32 4, %s17
          %s192 = ssub.s32 1024, 1024
          %193 = vsyncadd %s186, %s192
          %s194 = smul.addr %s190, 2
          %s195 = smul.addr %s194, 128
          %s196 = scalar_lea.hbm %s1, %s195
          %s197 = sshll.u32 %s189, 4
          %s198 = int_to_ptr.vmem [resolvable:$true] %s197
          %203 = dma.hbm_to_vmem [thread:$0]  %s196, 1024, %s198, %s186, 128, 128, 8
        $region32: #{tpu_custom_call.1} parent=23 // pred_fallthru
          _
      $region24: #{tpu_custom_call.1} parent=5 // pred_fallthru
        _
      %p204 = scmp.le.s32.totalorder 1, %s17
      %p205 = scmp.lt.s32.totalorder %s17, 3
      %p206 = pnand %p204, %p205
      %p207 = pneg %p206
      // Predicated region
      $region33: #{tpu_custom_call.1} parent=5 // pred_check
        _
      $region34: #{tpu_custom_call.1} parent=5 // pred_check_branch
        %209 = sbr.rel (%p206) target = $region36
      $region35: #{tpu_custom_call.1} parent=5 // pred_region
        %s210 = ssub.s32 %s17, 1
        %s211 = sand.u32 %s56, 1
        %s212 = scalar_lea.sflag [#allocation3], %s211
        %s213 = sand.u32 %s56, 1
        %s214 = smul.addr %s213, 64
        %s215 = scalar_lea.vmem [#allocation2], %s214
        // Predicated region
        $region37: #{tpu_custom_call.1} parent=35 // pred_check
          %p216 = pneg %p69
        $region38: #{tpu_custom_call.1} parent=35 // pred_check_branch
          %218 = sbr.rel (%p216) target = $region40
        $region39: #{tpu_custom_call.1} parent=35 // pred_region
          %219 = dma.done %s212, 1024
        $region40: #{tpu_custom_call.1} parent=35 // pred_fallthru
          _
        // Predicated region
        $region41: #{tpu_custom_call.1} parent=35 // pred_check
          %p220 = pneg %p111
        $region42: #{tpu_custom_call.1} parent=35 // pred_check_branch
          %222 = sbr.rel (%p220) target = $region44
        $region43: #{tpu_custom_call.1} parent=35 // pred_region
          %223 = dma.done [#allocation6], 1024
        $region44: #{tpu_custom_call.1} parent=35 // pred_fallthru
          _
        %s224 = smul.u32 4, %s22
        %p225 = scmp.lt.s32.totalorder %s224, 7
        %s226 = scalar_select %p225, %s224, 7
        %s227 = smul.addr %s226, 2
        %s228 = smul.addr %s227, 8
        %s229 = scalar_lea.vmem %s0, %s228
        %p230 = pneg %p43
        %p231 = pneg %p40
        %s232 = sand.u32 %s56, 1
        %s233 = scalar_lea.sflag [#allocation3], %s232
        %s234 = sand.u32 %s56, 1
        %s235 = smul.addr %s234, 64
        %s236 = scalar_lea.vmem [#allocation2], %s235
        %p237 = pneg %p69
        %p238 = pneg %p66
        %p239 = pneg %p90
        %p240 = pneg %p87
        %p241 = pneg %p111
        %p242 = pneg %p108
        %p243 = pneg %p137
        %p244 = pneg %p134
        %s245 = sand.u32 %s124, 1
        %s246 = scalar_lea.sflag [#allocation4], %s245
        %s247 = sand.u32 %s124, 1
        %s248 = scalar_lea.vmem [#allocation7], %s247
        %s249 = smul.u32 4, %s22
        %p250 = scmp.lt.s32.totalorder %s249, 7
        %s251 = scalar_select %p250, %s249, 7
        %s252 = smul.addr %s251, 2
        %s253 = smul.addr %s252, 8
        %s254 = scalar_lea.vmem %s0, %s253
        %s255 = smul.u32 4, %s22
        %s256 = smul.u32 4, %s22
        %v258 = vld [vmem:[%s254] sm:$0xff]
        %v259 = vld [vmem:[%s254 + $0x8] sm:$0xff]
        %v260 = vld [vmem:[%s254 + $0x10] sm:$0xff]
        %v261 = vld [vmem:[%s254 + $0x18] sm:$0xff]
        %v262 = vld [vmem:[%s254 + $0x20] sm:$0xff]
        %v263 = vld [vmem:[%s254 + $0x28] sm:$0xff]
        %v264 = vld [vmem:[%s254 + $0x30] sm:$0xff]
        %v265 = vld [vmem:[%s254 + $0x38] sm:$0xff]
        %v266 = vld [vmem:[%s215] sm:$0xff]
        %v267 = vld [vmem:[%s215 + $0x8] sm:$0xff]
        %v268 = vld [vmem:[%s215 + $0x10] sm:$0xff]
        %v269 = vld [vmem:[%s215 + $0x18] sm:$0xff]
        %v270 = vld [vmem:[%s215 + $0x20] sm:$0xff]
        %v271 = vld [vmem:[%s215 + $0x28] sm:$0xff]
        %v272 = vld [vmem:[%s215 + $0x30] sm:$0xff]
        %v273 = vld [vmem:[%s215 + $0x38] sm:$0xff]
        %v274 = vsub.f32 %v258, %v266
        %v275 = vsub.f32 %v259, %v267
        %v276 = vsub.f32 %v260, %v268
        %v277 = vsub.f32 %v261, %v269
        %v278 = vsub.f32 %v262, %v270
        %v279 = vsub.f32 %v263, %v271
        %v280 = vsub.f32 %v264, %v272
        %v281 = vsub.f32 %v265, %v273
        %v282 = vpack.c.bf16 %v275, %v274
        %v283 = vpack.c.bf16 %v277, %v276
        %v284 = vpack.c.bf16 %v279, %v278
        %v285 = vpack.c.bf16 %v281, %v280
        %v286 = vld [vmem:[#allocation5] sm:$0xff]
        %v287 = vld [vmem:[#allocation5 + $0x8] sm:$0xff]
        %v288 = vld [vmem:[#allocation5 + $0x10] sm:$0xff]
        %v289 = vld [vmem:[#allocation5 + $0x18] sm:$0xff]
        %v290 = vld [vmem:[#allocation5 + $0x20] sm:$0xff]
        %v291 = vld [vmem:[#allocation5 + $0x28] sm:$0xff]
        %v292 = vld [vmem:[#allocation5 + $0x30] sm:$0xff]
        %v293 = vld [vmem:[#allocation5 + $0x38] sm:$0xff]
        %v302 = vunpack.c.l.b16 %v286
        %v303 = vunpack.c.h.b16 %v286
        %v304 = vunpack.c.l.b16 %v287
        %v305 = vunpack.c.h.b16 %v287
        %v306 = vunpack.c.l.b16 %v288
        %v307 = vunpack.c.h.b16 %v288
        %v308 = vunpack.c.l.b16 %v289
        %v309 = vunpack.c.h.b16 %v289
        %v310 = vunpack.c.l.b16 %v290
        %v311 = vunpack.c.h.b16 %v290
        %v312 = vunpack.c.l.b16 %v291
        %v313 = vunpack.c.h.b16 %v291
        %v314 = vunpack.c.l.b16 %v292
        %v315 = vunpack.c.h.b16 %v292
        %v316 = vunpack.c.l.b16 %v293
        %v317 = vunpack.c.h.b16 %v293
        %v318 = vpack.c.b16 %v310, %v302
        %v319 = vpack.c.b16 %v311, %v303
        %v320 = vpack.c.b16 %v312, %v304
        %v321 = vpack.c.b16 %v313, %v305
        %v322 = vpack.c.b16 %v314, %v306
        %v323 = vpack.c.b16 %v315, %v307
        %v324 = vpack.c.b16 %v316, %v308
        %v325 = vpack.c.b16 %v317, %v309
        %vm334 = vcmask 130048
        %v336 = vsel %vm334, %v282, 0
        %v339 = vsel %vm334, %v283, 0
        %v342 = vsel %vm334, %v284, 0
        %v345 = vsel %vm334, %v285, 0
        %347 = vmatprep.subr.bf16.mxu0 %v319
        %348 = vmatpush1.bf16.msra.mxu0 %v318
        %349 = vmatprep.subr.bf16.mxu0 0
        %350 = vmatpush1.bf16.msra.mxu0 0
        %351 = vmatprep.subr.bf16.mxu0 0
        %352 = vmatpush1.bf16.msra.mxu0 0
        %353 = vmatprep.subr.bf16.mxu0 0
        %354 = vmatpush1.bf16.msra.mxu0 0
        %355 = vmatprep.subr.bf16.mxu0 0
        %356 = vmatpush1.bf16.msra.mxu0 0
        %357 = vmatprep.subr.bf16.mxu0 0
        %358 = vmatpush1.bf16.msra.mxu0 0
        %359 = vmatprep.subr.bf16.mxu0 0
        %360 = vmatpush1.bf16.msra.mxu0 0
        %361 = vmatprep.subr.bf16.mxu0 0
        %362 = vmatpush1.bf16.msra.mxu0 0
        %363 = vmatprep.subr.bf16.mxu0 0
        %364 = vmatpush1.bf16.msra.mxu0 0
        %365 = vmatprep.subr.bf16.mxu0 0
        %366 = vmatpush1.bf16.msra.mxu0 0
        %367 = vmatprep.subr.bf16.mxu0 0
        %368 = vmatpush1.bf16.msra.mxu0 0
        %369 = vmatprep.subr.bf16.mxu0 0
        %370 = vmatpush1.bf16.msra.mxu0 0
        %371 = vmatprep.subr.bf16.mxu0 0
        %372 = vmatpush1.bf16.msra.mxu0 0
        %373 = vmatprep.subr.bf16.mxu0 0
        %374 = vmatpush1.bf16.msra.mxu0 0
        %375 = vmatprep.subr.bf16.mxu0 0
        %376 = vmatpush1.bf16.msra.mxu0 0
        %377 = vmatprep.subr.bf16.mxu0 0
        %378 = vmatpush1.bf16.msra.mxu0 0
        %379 = vmatprep.mubr.bf16.mxu0 0
        %380 = vmatmul.mubr.bf16.gmra.mrb[0].mxu0 %v336
        %v381 = vpop.f32.mrb[0].mxu0
        %v382 = vadd.f32 0.0, %v381
        %v383 = vpop.f32.mrb[0].mxu0
        %v384 = vadd.f32 0.0, %v383
        %v385 = vpop.f32.mrb[0].mxu0
        %v386 = vadd.f32 0.0, %v385
        %v387 = vpop.f32.mrb[0].mxu0
        %v388 = vadd.f32 0.0, %v387
        %389 = vmatprep.mubr.bf16.mxu0 0
        %390 = vmatmul.mubr.bf16.gmra.mrb[0].mxu0 %v339
        %v391 = vpop.f32.mrb[0].mxu0
        %v392 = vadd.f32 0.0, %v391
        %v393 = vpop.f32.mrb[0].mxu0
        %v394 = vadd.f32 0.0, %v393
        %v395 = vpop.f32.mrb[0].mxu0
        %v396 = vadd.f32 0.0, %v395
        %v397 = vpop.f32.mrb[0].mxu0
        %v398 = vadd.f32 0.0, %v397
        %399 = vmatprep.mubr.bf16.mxu0 0
        %400 = vmatmul.mubr.bf16.gmra.mrb[0].mxu0 %v342
        %v401 = vpop.f32.mrb[0].mxu0
        %v402 = vadd.f32 0.0, %v401
        %v403 = vpop.f32.mrb[0].mxu0
        %v404 = vadd.f32 0.0, %v403
        %v405 = vpop.f32.mrb[0].mxu0
        %v406 = vadd.f32 0.0, %v405
        %v407 = vpop.f32.mrb[0].mxu0
        %v408 = vadd.f32 0.0, %v407
        %409 = vmatprep.mubr.bf16.mxu0 0
        %410 = vmatmul.mubr.bf16.gmra.mrb[0].mxu0 %v345
        %v411 = vpop.f32.mrb[0].mxu0
        %v412 = vadd.f32 0.0, %v411
        %v413 = vpop.f32.mrb[0].mxu0
        %v414 = vadd.f32 0.0, %v413
        %v415 = vpop.f32.mrb[0].mxu0
        %v416 = vadd.f32 0.0, %v415
        %v417 = vpop.f32.mrb[0].mxu0
        %v418 = vadd.f32 0.0, %v417
        %419 = vdwg.mxu0
        %420 = vmatprep.subr.bf16.mxu0 %v321
        %421 = vmatpush1.bf16.msra.mxu0 %v320
        %422 = vmatprep.subr.bf16.mxu0 0
        %423 = vmatpush1.bf16.msra.mxu0 0
        %424 = vmatprep.subr.bf16.mxu0 0
        %425 = vmatpush1.bf16.msra.mxu0 0
        %426 = vmatprep.subr.bf16.mxu0 0
        %427 = vmatpush1.bf16.msra.mxu0 0
        %428 = vmatprep.subr.bf16.mxu0 0
        %429 = vmatpush1.bf16.msra.mxu0 0
        %430 = vmatprep.subr.bf16.mxu0 0
        %431 = vmatpush1.bf16.msra.mxu0 0
        %432 = vmatprep.subr.bf16.mxu0 0
        %433 = vmatpush1.bf16.msra.mxu0 0
        %434 = vmatprep.subr.bf16.mxu0 0
        %435 = vmatpush1.bf16.msra.mxu0 0
        %436 = vmatprep.subr.bf16.mxu0 0
        %437 = vmatpush1.bf16.msra.mxu0 0
        %438 = vmatprep.subr.bf16.mxu0 0
        %439 = vmatpush1.bf16.msra.mxu0 0
        %440 = vmatprep.subr.bf16.mxu0 0
        %441 = vmatpush1.bf16.msra.mxu0 0
        %442 = vmatprep.subr.bf16.mxu0 0
        %443 = vmatpush1.bf16.msra.mxu0 0
        %444 = vmatprep.subr.bf16.mxu0 0
        %445 = vmatpush1.bf16.msra.mxu0 0
        %446 = vmatprep.subr.bf16.mxu0 0
        %447 = vmatpush1.bf16.msra.mxu0 0
        %448 = vmatprep.subr.bf16.mxu0 0
        %449 = vmatpush1.bf16.msra.mxu0 0
        %450 = vmatprep.subr.bf16.mxu0 0
        %451 = vmatpush1.bf16.msra.mxu0 0
        %452 = vmatprep.mubr.bf16.mxu0 0
        %453 = vmatmul.mubr.bf16.gmra.mrb[0].mxu0 %v336
        %v454 = vpop.f32.mrb[0].mxu0
        %v455 = vadd.f32 0.0, %v454
        %v456 = vpop.f32.mrb[0].mxu0
        %v457 = vadd.f32 0.0, %v456
        %v458 = vpop.f32.mrb[0].mxu0
        %v459 = vadd.f32 0.0, %v458
        %v460 = vpop.f32.mrb[0].mxu0
        %v461 = vadd.f32 0.0, %v460
        %462 = vmatprep.mubr.bf16.mxu0 0
        %463 = vmatmul.mubr.bf16.gmra.mrb[0].mxu0 %v339
        %v464 = vpop.f32.mrb[0].mxu0
        %v465 = vadd.f32 0.0, %v464
        %v466 = vpop.f32.mrb[0].mxu0
        %v467 = vadd.f32 0.0, %v466
        %v468 = vpop.f32.mrb[0].mxu0
        %v469 = vadd.f32 0.0, %v468
        %v470 = vpop.f32.mrb[0].mxu0
        %v471 = vadd.f32 0.0, %v470
        %472 = vmatprep.mubr.bf16.mxu0 0
        %473 = vmatmul.mubr.bf16.gmra.mrb[0].mxu0 %v342
        %v474 = vpop.f32.mrb[0].mxu0
        %v475 = vadd.f32 0.0, %v474
        %v476 = vpop.f32.mrb[0].mxu0
        %v477 = vadd.f32 0.0, %v476
        %v478 = vpop.f32.mrb[0].mxu0
        %v479 = vadd.f32 0.0, %v478
        %v480 = vpop.f32.mrb[0].mxu0
        %v481 = vadd.f32 0.0, %v480
        %482 = vmatprep.mubr.bf16.mxu0 0
        %483 = vmatmul.mubr.bf16.gmra.mrb[0].mxu0 %v345
        %v484 = vpop.f32.mrb[0].mxu0
        %v485 = vadd.f32 0.0, %v484
        %v486 = vpop.f32.mrb[0].mxu0
        %v487 = vadd.f32 0.0, %v486
        %v488 = vpop.f32.mrb[0].mxu0
        %v489 = vadd.f32 0.0, %v488
        %v490 = vpop.f32.mrb[0].mxu0
        %v491 = vadd.f32 0.0, %v490
        %492 = vdwg.mxu0
        %493 = vmatprep.subr.bf16.mxu0 %v323
        %494 = vmatpush1.bf16.msra.mxu0 %v322
        %495 = vmatprep.subr.bf16.mxu0 0
        %496 = vmatpush1.bf16.msra.mxu0 0
        %497 = vmatprep.subr.bf16.mxu0 0
        %498 = vmatpush1.bf16.msra.mxu0 0
        %499 = vmatprep.subr.bf16.mxu0 0
        %500 = vmatpush1.bf16.msra.mxu0 0
        %501 = vmatprep.subr.bf16.mxu0 0
        %502 = vmatpush1.bf16.msra.mxu0 0
        %503 = vmatprep.subr.bf16.mxu0 0
        %504 = vmatpush1.bf16.msra.mxu0 0
        %505 = vmatprep.subr.bf16.mxu0 0
        %506 = vmatpush1.bf16.msra.mxu0 0
        %507 = vmatprep.subr.bf16.mxu0 0
        %508 = vmatpush1.bf16.msra.mxu0 0
        %509 = vmatprep.subr.bf16.mxu0 0
        %510 = vmatpush1.bf16.msra.mxu0 0
        %511 = vmatprep.subr.bf16.mxu0 0
        %512 = vmatpush1.bf16.msra.mxu0 0
        %513 = vmatprep.subr.bf16.mxu0 0
        %514 = vmatpush1.bf16.msra.mxu0 0
        %515 = vmatprep.subr.bf16.mxu0 0
        %516 = vmatpush1.bf16.msra.mxu0 0
        %517 = vmatprep.subr.bf16.mxu0 0
        %518 = vmatpush1.bf16.msra.mxu0 0
        %519 = vmatprep.subr.bf16.mxu0 0
        %520 = vmatpush1.bf16.msra.mxu0 0
        %521 = vmatprep.subr.bf16.mxu0 0
        %522 = vmatpush1.bf16.msra.mxu0 0
        %523 = vmatprep.subr.bf16.mxu0 0
        %524 = vmatpush1.bf16.msra.mxu0 0
        %525 = vmatprep.mubr.bf16.mxu0 0
        %526 = vmatmul.mubr.bf16.gmra.mrb[0].mxu0 %v336
        %v527 = vpop.f32.mrb[0].mxu0
        %v528 = vadd.f32 0.0, %v527
        %v529 = vpop.f32.mrb[0].mxu0
        %v530 = vadd.f32 0.0, %v529
        %v531 = vpop.f32.mrb[0].mxu0
        %v532 = vadd.f32 0.0, %v531
        %v533 = vpop.f32.mrb[0].mxu0
        %v534 = vadd.f32 0.0, %v533
        %535 = vmatprep.mubr.bf16.mxu0 0
        %536 = vmatmul.mubr.bf16.gmra.mrb[0].mxu0 %v339
        %v537 = vpop.f32.mrb[0].mxu0
        %v538 = vadd.f32 0.0, %v537
        %v539 = vpop.f32.mrb[0].mxu0
        %v540 = vadd.f32 0.0, %v539
        %v541 = vpop.f32.mrb[0].mxu0
        %v542 = vadd.f32 0.0, %v541
        %v543 = vpop.f32.mrb[0].mxu0
        %v544 = vadd.f32 0.0, %v543
        %545 = vmatprep.mubr.bf16.mxu0 0
        %546 = vmatmul.mubr.bf16.gmra.mrb[0].mxu0 %v342
        %v547 = vpop.f32.mrb[0].mxu0
        %v548 = vadd.f32 0.0, %v547
        %v549 = vpop.f32.mrb[0].mxu0
        %v550 = vadd.f32 0.0, %v549
        %v551 = vpop.f32.mrb[0].mxu0
        %v552 = vadd.f32 0.0, %v551
        %v553 = vpop.f32.mrb[0].mxu0
        %v554 = vadd.f32 0.0, %v553
        %555 = vmatprep.mubr.bf16.mxu0 0
        %556 = vmatmul.mubr.bf16.gmra.mrb[0].mxu0 %v345
        %v557 = vpop.f32.mrb[0].mxu0
        %v558 = vadd.f32 0.0, %v557
        %v559 = vpop.f32.mrb[0].mxu0
        %v560 = vadd.f32 0.0, %v559
        %v561 = vpop.f32.mrb[0].mxu0
        %v562 = vadd.f32 0.0, %v561
        %v563 = vpop.f32.mrb[0].mxu0
        %v564 = vadd.f32 0.0, %v563
        %565 = vdwg.mxu0
        %566 = vmatprep.subr.bf16.mxu0 %v325
        %567 = vmatpush1.bf16.msra.mxu0 %v324
        %568 = vmatprep.subr.bf16.mxu0 0
        %569 = vmatpush1.bf16.msra.mxu0 0
        %570 = vmatprep.subr.bf16.mxu0 0
        %571 = vmatpush1.bf16.msra.mxu0 0
        %572 = vmatprep.subr.bf16.mxu0 0
        %573 = vmatpush1.bf16.msra.mxu0 0
        %574 = vmatprep.subr.bf16.mxu0 0
        %575 = vmatpush1.bf16.msra.mxu0 0
        %576 = vmatprep.subr.bf16.mxu0 0
        %577 = vmatpush1.bf16.msra.mxu0 0
        %578 = vmatprep.subr.bf16.mxu0 0
        %579 = vmatpush1.bf16.msra.mxu0 0
        %580 = vmatprep.subr.bf16.mxu0 0
        %581 = vmatpush1.bf16.msra.mxu0 0
        %582 = vmatprep.subr.bf16.mxu0 0
        %583 = vmatpush1.bf16.msra.mxu0 0
        %584 = vmatprep.subr.bf16.mxu0 0
        %585 = vmatpush1.bf16.msra.mxu0 0
        %586 = vmatprep.subr.bf16.mxu0 0
        %587 = vmatpush1.bf16.msra.mxu0 0
        %588 = vmatprep.subr.bf16.mxu0 0
        %589 = vmatpush1.bf16.msra.mxu0 0
        %590 = vmatprep.subr.bf16.mxu0 0
        %591 = vmatpush1.bf16.msra.mxu0 0
        %592 = vmatprep.subr.bf16.mxu0 0
        %593 = vmatpush1.bf16.msra.mxu0 0
        %594 = vmatprep.subr.bf16.mxu0 0
        %595 = vmatpush1.bf16.msra.mxu0 0
        %596 = vmatprep.subr.bf16.mxu0 0
        %597 = vmatpush1.bf16.msra.mxu0 0
        %598 = vmatprep.mubr.bf16.mxu0 0
        %599 = vmatmul.mubr.bf16.gmra.mrb[0].mxu0 %v336
        %v600 = vpop.f32.mrb[0].mxu0
        %v601 = vadd.f32 0.0, %v600
        %v602 = vpop.f32.mrb[0].mxu0
        %v603 = vadd.f32 0.0, %v602
        %v604 = vpop.f32.mrb[0].mxu0
        %v605 = vadd.f32 0.0, %v604
        %v606 = vpop.f32.mrb[0].mxu0
        %v607 = vadd.f32 0.0, %v606
        %608 = vmatprep.mubr.bf16.mxu0 0
        %609 = vmatmul.mubr.bf16.gmra.mrb[0].mxu0 %v339
        %v610 = vpop.f32.mrb[0].mxu0
        %v611 = vadd.f32 0.0, %v610
        %v612 = vpop.f32.mrb[0].mxu0
        %v613 = vadd.f32 0.0, %v612
        %v614 = vpop.f32.mrb[0].mxu0
        %v615 = vadd.f32 0.0, %v614
        %v616 = vpop.f32.mrb[0].mxu0
        %v617 = vadd.f32 0.0, %v616
        %618 = vmatprep.mubr.bf16.mxu0 0
        %619 = vmatmul.mubr.bf16.gmra.mrb[0].mxu0 %v342
        %v620 = vpop.f32.mrb[0].mxu0
        %v621 = vadd.f32 0.0, %v620
        %v622 = vpop.f32.mrb[0].mxu0
        %v623 = vadd.f32 0.0, %v622
        %v624 = vpop.f32.mrb[0].mxu0
        %v625 = vadd.f32 0.0, %v624
        %v626 = vpop.f32.mrb[0].mxu0
        %v627 = vadd.f32 0.0, %v626
        %628 = vmatprep.mubr.bf16.mxu0 0
        %629 = vmatmul.mubr.bf16.gmra.mrb[0].mxu0 %v345
        %v630 = vpop.f32.mrb[0].mxu0
        %v631 = vadd.f32 0.0, %v630
        %v632 = vpop.f32.mrb[0].mxu0
        %v633 = vadd.f32 0.0, %v632
        %v634 = vpop.f32.mrb[0].mxu0
        %v635 = vadd.f32 0.0, %v634
        %v636 = vpop.f32.mrb[0].mxu0
        %v637 = vadd.f32 0.0, %v636
        %638 = vdwg.mxu0
        %v639 = vpack.c.bf16 %v386, %v382
        %v640 = vpack.c.bf16 %v388, %v384
        %v641 = vpack.c.bf16 %v459, %v455
        %v642 = vpack.c.bf16 %v461, %v457
        %v643 = vpack.c.bf16 %v532, %v528
        %v644 = vpack.c.bf16 %v534, %v530
        %v645 = vpack.c.bf16 %v605, %v601
        %v646 = vpack.c.bf16 %v607, %v603
        %v647 = vpack.c.bf16 %v396, %v392
        %v648 = vpack.c.bf16 %v398, %v394
        %v649 = vpack.c.bf16 %v469, %v465
        %v650 = vpack.c.bf16 %v471, %v467
        %v651 = vpack.c.bf16 %v542, %v538
        %v652 = vpack.c.bf16 %v544, %v540
        %v653 = vpack.c.bf16 %v615, %v611
        %v654 = vpack.c.bf16 %v617, %v613
        %v655 = vpack.c.bf16 %v406, %v402
        %v656 = vpack.c.bf16 %v408, %v404
        %v657 = vpack.c.bf16 %v479, %v475
        %v658 = vpack.c.bf16 %v481, %v477
        %v659 = vpack.c.bf16 %v552, %v548
        %v660 = vpack.c.bf16 %v554, %v550
        %v661 = vpack.c.bf16 %v625, %v621
        %v662 = vpack.c.bf16 %v627, %v623
        %v663 = vpack.c.bf16 %v416, %v412
        %v664 = vpack.c.bf16 %v418, %v414
        %v665 = vpack.c.bf16 %v489, %v485
        %v666 = vpack.c.bf16 %v491, %v487
        %v667 = vpack.c.bf16 %v562, %v558
        %v668 = vpack.c.bf16 %v564, %v560
        %v669 = vpack.c.bf16 %v635, %v631
        %v670 = vpack.c.bf16 %v637, %v633
        %v672 = vsel %vm334, %v282, 0
        %v674 = vsel %vm334, %v283, 0
        %v676 = vsel %vm334, %v284, 0
        %v678 = vsel %vm334, %v285, 0
        %680 = vmatprep.subr.bf16.mxu0 0
        %681 = vmatpush1.bf16.xpose.msra.mxu0 %v672
        %682 = vmatprep.subr.bf16.mxu0 0
        %683 = vmatpush1.bf16.xpose.msra.mxu0 0
        %684 = vmatprep.subr.bf16.mxu0 0
        %685 = vmatpush1.bf16.xpose.msra.mxu0 0
        %686 = vmatprep.subr.bf16.mxu0 0
        %687 = vmatpush1.bf16.xpose.msra.mxu0 0
        %688 = vmatprep.subr.bf16.mxu0 0
        %689 = vmatpush1.bf16.xpose.msra.mxu0 0
        %690 = vmatprep.subr.bf16.mxu0 0
        %691 = vmatpush1.bf16.xpose.msra.mxu0 0
        %692 = vmatprep.subr.bf16.mxu0 0
        %693 = vmatpush1.bf16.xpose.msra.mxu0 0
        %694 = vmatprep.subr.bf16.mxu0 0
        %695 = vmatpush1.bf16.xpose.msra.mxu0 0
        %696 = vmatprep.subr.bf16.mxu0 0
        %697 = vmatpush1.bf16.xpose.msra.mxu0 0
        %698 = vmatprep.subr.bf16.mxu0 0
        %699 = vmatpush1.bf16.xpose.msra.mxu0 0
        %700 = vmatprep.subr.bf16.mxu0 0
        %701 = vmatpush1.bf16.xpose.msra.mxu0 0
        %702 = vmatprep.subr.bf16.mxu0 0
        %703 = vmatpush1.bf16.xpose.msra.mxu0 0
        %704 = vmatprep.subr.bf16.mxu0 0
        %705 = vmatpush1.bf16.xpose.msra.mxu0 0
        %706 = vmatprep.subr.bf16.mxu0 0
        %707 = vmatpush1.bf16.xpose.msra.mxu0 0
        %708 = vmatprep.subr.bf16.mxu0 0
        %709 = vmatpush1.bf16.xpose.msra.mxu0 0
        %710 = vmatprep.subr.bf16.mxu0 0
        %711 = vmatpush1.bf16.xpose.msra.mxu0 0
        %712 = vmatprep.mubr.bf16.mxu0 0
        %713 = vmatmul.mubr.bf16.gmra.mrb[0].mxu0 %v639
        %v714 = vpop.f32.mrb[0].mxu0
        %v715 = vadd.f32 0.0, %v714
        %v716 = vpop.f32.mrb[0].mxu0
        %v717 = vpop.f32.mrb[0].mxu0
        %v718 = vadd.f32 0.0, %v717
        %v719 = vpop.f32.mrb[0].mxu0
        %720 = vmatprep.mubr.bf16.mxu0 0
        %721 = vmatmul.mubr.bf16.gmra.mrb[0].mxu0 %v640
        %v722 = vpop.f32.mrb[0].mxu0
        %v723 = vadd.f32 0.0, %v722
        %v724 = vpop.f32.mrb[0].mxu0
        %v725 = vpop.f32.mrb[0].mxu0
        %v726 = vadd.f32 0.0, %v725
        %v727 = vpop.f32.mrb[0].mxu0
        %728 = vmatprep.mubr.bf16.mxu0 0
        %729 = vmatmul.mubr.bf16.gmra.mrb[0].mxu0 %v641
        %v730 = vpop.f32.mrb[0].mxu0
        %v731 = vadd.f32 0.0, %v730
        %v732 = vpop.f32.mrb[0].mxu0
        %v733 = vpop.f32.mrb[0].mxu0
        %v734 = vadd.f32 0.0, %v733
        %v735 = vpop.f32.mrb[0].mxu0
        %736 = vmatprep.mubr.bf16.mxu0 0
        %737 = vmatmul.mubr.bf16.gmra.mrb[0].mxu0 %v642
        %v738 = vpop.f32.mrb[0].mxu0
        %v739 = vadd.f32 0.0, %v738
        %v740 = vpop.f32.mrb[0].mxu0
        %v741 = vpop.f32.mrb[0].mxu0
        %v742 = vadd.f32 0.0, %v741
        %v743 = vpop.f32.mrb[0].mxu0
        %744 = vmatprep.mubr.bf16.mxu0 0
        %745 = vmatmul.mubr.bf16.gmra.mrb[0].mxu0 %v643
        %v746 = vpop.f32.mrb[0].mxu0
        %v747 = vadd.f32 0.0, %v746
        %v748 = vpop.f32.mrb[0].mxu0
        %v749 = vpop.f32.mrb[0].mxu0
        %v750 = vadd.f32 0.0, %v749
        %v751 = vpop.f32.mrb[0].mxu0
        %752 = vmatprep.mubr.bf16.mxu0 0
        %753 = vmatmul.mubr.bf16.gmra.mrb[0].mxu0 %v644
        %v754 = vpop.f32.mrb[0].mxu0
        %v755 = vadd.f32 0.0, %v754
        %v756 = vpop.f32.mrb[0].mxu0
        %v757 = vpop.f32.mrb[0].mxu0
        %v758 = vadd.f32 0.0, %v757
        %v759 = vpop.f32.mrb[0].mxu0
        %760 = vmatprep.mubr.bf16.mxu0 0
        %761 = vmatmul.mubr.bf16.gmra.mrb[0].mxu0 %v645
        %v762 = vpop.f32.mrb[0].mxu0
        %v763 = vadd.f32 0.0, %v762
        %v764 = vpop.f32.mrb[0].mxu0
        %v765 = vpop.f32.mrb[0].mxu0
        %v766 = vadd.f32 0.0, %v765
        %v767 = vpop.f32.mrb[0].mxu0
        %768 = vmatprep.mubr.bf16.mxu0 0
        %769 = vmatmul.mubr.bf16.gmra.mrb[0].mxu0 %v646
        %v770 = vpop.f32.mrb[0].mxu0
        %v771 = vadd.f32 0.0, %v770
        %v772 = vpop.f32.mrb[0].mxu0
        %v773 = vpop.f32.mrb[0].mxu0
        %v774 = vadd.f32 0.0, %v773
        %v775 = vpop.f32.mrb[0].mxu0
        %776 = vdwg.mxu0
        %777 = vmatprep.subr.bf16.mxu0 0
        %778 = vmatpush1.bf16.xpose.msra.mxu0 %v674
        %779 = vmatprep.subr.bf16.mxu0 0
        %780 = vmatpush1.bf16.xpose.msra.mxu0 0
        %781 = vmatprep.subr.bf16.mxu0 0
        %782 = vmatpush1.bf16.xpose.msra.mxu0 0
        %783 = vmatprep.subr.bf16.mxu0 0
        %784 = vmatpush1.bf16.xpose.msra.mxu0 0
        %785 = vmatprep.subr.bf16.mxu0 0
        %786 = vmatpush1.bf16.xpose.msra.mxu0 0
        %787 = vmatprep.subr.bf16.mxu0 0
        %788 = vmatpush1.bf16.xpose.msra.mxu0 0
        %789 = vmatprep.subr.bf16.mxu0 0
        %790 = vmatpush1.bf16.xpose.msra.mxu0 0
        %791 = vmatprep.subr.bf16.mxu0 0
        %792 = vmatpush1.bf16.xpose.msra.mxu0 0
        %793 = vmatprep.subr.bf16.mxu0 0
        %794 = vmatpush1.bf16.xpose.msra.mxu0 0
        %795 = vmatprep.subr.bf16.mxu0 0
        %796 = vmatpush1.bf16.xpose.msra.mxu0 0
        %797 = vmatprep.subr.bf16.mxu0 0
        %798 = vmatpush1.bf16.xpose.msra.mxu0 0
        %799 = vmatprep.subr.bf16.mxu0 0
        %800 = vmatpush1.bf16.xpose.msra.mxu0 0
        %801 = vmatprep.subr.bf16.mxu0 0
        %802 = vmatpush1.bf16.xpose.msra.mxu0 0
        %803 = vmatprep.subr.bf16.mxu0 0
        %804 = vmatpush1.bf16.xpose.msra.mxu0 0
        %805 = vmatprep.subr.bf16.mxu0 0
        %806 = vmatpush1.bf16.xpose.msra.mxu0 0
        %807 = vmatprep.subr.bf16.mxu0 0
        %808 = vmatpush1.bf16.xpose.msra.mxu0 0
        %809 = vmatprep.mubr.bf16.mxu0 0
        %810 = vmatmul.mubr.bf16.gmra.mrb[0].mxu0 %v647
        %v811 = vpop.f32.mrb[0].mxu0
        %v812 = vadd.f32 0.0, %v811
        %v813 = vpop.f32.mrb[0].mxu0
        %v814 = vpop.f32.mrb[0].mxu0
        %v815 = vadd.f32 0.0, %v814
        %v816 = vpop.f32.mrb[0].mxu0
        %817 = vmatprep.mubr.bf16.mxu0 0
        %818 = vmatmul.mubr.bf16.gmra.mrb[0].mxu0 %v648
        %v819 = vpop.f32.mrb[0].mxu0
        %v820 = vadd.f32 0.0, %v819
        %v821 = vpop.f32.mrb[0].mxu0
        %v822 = vpop.f32.mrb[0].mxu0
        %v823 = vadd.f32 0.0, %v822
        %v824 = vpop.f32.mrb[0].mxu0
        %825 = vmatprep.mubr.bf16.mxu0 0
        %826 = vmatmul.mubr.bf16.gmra.mrb[0].mxu0 %v649
        %v827 = vpop.f32.mrb[0].mxu0
        %v828 = vadd.f32 0.0, %v827
        %v829 = vpop.f32.mrb[0].mxu0
        %v830 = vpop.f32.mrb[0].mxu0
        %v831 = vadd.f32 0.0, %v830
        %v832 = vpop.f32.mrb[0].mxu0
        %833 = vmatprep.mubr.bf16.mxu0 0
        %834 = vmatmul.mubr.bf16.gmra.mrb[0].mxu0 %v650
        %v835 = vpop.f32.mrb[0].mxu0
        %v836 = vadd.f32 0.0, %v835
        %v837 = vpop.f32.mrb[0].mxu0
        %v838 = vpop.f32.mrb[0].mxu0
        %v839 = vadd.f32 0.0, %v838
        %v840 = vpop.f32.mrb[0].mxu0
        %841 = vmatprep.mubr.bf16.mxu0 0
        %842 = vmatmul.mubr.bf16.gmra.mrb[0].mxu0 %v651
        %v843 = vpop.f32.mrb[0].mxu0
        %v844 = vadd.f32 0.0, %v843
        %v845 = vpop.f32.mrb[0].mxu0
        %v846 = vpop.f32.mrb[0].mxu0
        %v847 = vadd.f32 0.0, %v846
        %v848 = vpop.f32.mrb[0].mxu0
        %849 = vmatprep.mubr.bf16.mxu0 0
        %850 = vmatmul.mubr.bf16.gmra.mrb[0].mxu0 %v652
        %v851 = vpop.f32.mrb[0].mxu0
        %v852 = vadd.f32 0.0, %v851
        %v853 = vpop.f32.mrb[0].mxu0
        %v854 = vpop.f32.mrb[0].mxu0
        %v855 = vadd.f32 0.0, %v854
        %v856 = vpop.f32.mrb[0].mxu0
        %857 = vmatprep.mubr.bf16.mxu0 0
        %858 = vmatmul.mubr.bf16.gmra.mrb[0].mxu0 %v653
        %v859 = vpop.f32.mrb[0].mxu0
        %v860 = vadd.f32 0.0, %v859
        %v861 = vpop.f32.mrb[0].mxu0
        %v862 = vpop.f32.mrb[0].mxu0
        %v863 = vadd.f32 0.0, %v862
        %v864 = vpop.f32.mrb[0].mxu0
        %865 = vmatprep.mubr.bf16.mxu0 0
        %866 = vmatmul.mubr.bf16.gmra.mrb[0].mxu0 %v654
        %v867 = vpop.f32.mrb[0].mxu0
        %v868 = vadd.f32 0.0, %v867
        %v869 = vpop.f32.mrb[0].mxu0
        %v870 = vpop.f32.mrb[0].mxu0
        %v871 = vadd.f32 0.0, %v870
        %v872 = vpop.f32.mrb[0].mxu0
        %873 = vdwg.mxu0
        %874 = vmatprep.subr.bf16.mxu0 0
        %875 = vmatpush1.bf16.xpose.msra.mxu0 %v676
        %876 = vmatprep.subr.bf16.mxu0 0
        %877 = vmatpush1.bf16.xpose.msra.mxu0 0
        %878 = vmatprep.subr.bf16.mxu0 0
        %879 = vmatpush1.bf16.xpose.msra.mxu0 0
        %880 = vmatprep.subr.bf16.mxu0 0
        %881 = vmatpush1.bf16.xpose.msra.mxu0 0
        %882 = vmatprep.subr.bf16.mxu0 0
        %883 = vmatpush1.bf16.xpose.msra.mxu0 0
        %884 = vmatprep.subr.bf16.mxu0 0
        %885 = vmatpush1.bf16.xpose.msra.mxu0 0
        %886 = vmatprep.subr.bf16.mxu0 0
        %887 = vmatpush1.bf16.xpose.msra.mxu0 0
        %888 = vmatprep.subr.bf16.mxu0 0
        %889 = vmatpush1.bf16.xpose.msra.mxu0 0
        %890 = vmatprep.subr.bf16.mxu0 0
        %891 = vmatpush1.bf16.xpose.msra.mxu0 0
        %892 = vmatprep.subr.bf16.mxu0 0
        %893 = vmatpush1.bf16.xpose.msra.mxu0 0
        %894 = vmatprep.subr.bf16.mxu0 0
        %895 = vmatpush1.bf16.xpose.msra.mxu0 0
        %896 = vmatprep.subr.bf16.mxu0 0
        %897 = vmatpush1.bf16.xpose.msra.mxu0 0
        %898 = vmatprep.subr.bf16.mxu0 0
        %899 = vmatpush1.bf16.xpose.msra.mxu0 0
        %900 = vmatprep.subr.bf16.mxu0 0
        %901 = vmatpush1.bf16.xpose.msra.mxu0 0
        %902 = vmatprep.subr.bf16.mxu0 0
        %903 = vmatpush1.bf16.xpose.msra.mxu0 0
        %904 = vmatprep.subr.bf16.mxu0 0
        %905 = vmatpush1.bf16.xpose.msra.mxu0 0
        %906 = vmatprep.mubr.bf16.mxu0 0
        %907 = vmatmul.mubr.bf16.gmra.mrb[0].mxu0 %v655
        %v908 = vpop.f32.mrb[0].mxu0
        %v909 = vadd.f32 0.0, %v908
        %v910 = vpop.f32.mrb[0].mxu0
        %v911 = vpop.f32.mrb[0].mxu0
        %v912 = vadd.f32 0.0, %v911
        %v913 = vpop.f32.mrb[0].mxu0
        %914 = vmatprep.mubr.bf16.mxu0 0
        %915 = vmatmul.mubr.bf16.gmra.mrb[0].mxu0 %v656
        %v916 = vpop.f32.mrb[0].mxu0
        %v917 = vadd.f32 0.0, %v916
        %v918 = vpop.f32.mrb[0].mxu0
        %v919 = vpop.f32.mrb[0].mxu0
        %v920 = vadd.f32 0.0, %v919
        %v921 = vpop.f32.mrb[0].mxu0
        %922 = vmatprep.mubr.bf16.mxu0 0
        %923 = vmatmul.mubr.bf16.gmra.mrb[0].mxu0 %v657
        %v924 = vpop.f32.mrb[0].mxu0
        %v925 = vadd.f32 0.0, %v924
        %v926 = vpop.f32.mrb[0].mxu0
        %v927 = vpop.f32.mrb[0].mxu0
        %v928 = vadd.f32 0.0, %v927
        %v929 = vpop.f32.mrb[0].mxu0
        %930 = vmatprep.mubr.bf16.mxu0 0
        %931 = vmatmul.mubr.bf16.gmra.mrb[0].mxu0 %v658
        %v932 = vpop.f32.mrb[0].mxu0
        %v933 = vadd.f32 0.0, %v932
        %v934 = vpop.f32.mrb[0].mxu0
        %v935 = vpop.f32.mrb[0].mxu0
        %v936 = vadd.f32 0.0, %v935
        %v937 = vpop.f32.mrb[0].mxu0
        %938 = vmatprep.mubr.bf16.mxu0 0
        %939 = vmatmul.mubr.bf16.gmra.mrb[0].mxu0 %v659
        %v940 = vpop.f32.mrb[0].mxu0
        %v941 = vadd.f32 0.0, %v940
        %v942 = vpop.f32.mrb[0].mxu0
        %v943 = vpop.f32.mrb[0].mxu0
        %v944 = vadd.f32 0.0, %v943
        %v945 = vpop.f32.mrb[0].mxu0
        %946 = vmatprep.mubr.bf16.mxu0 0
        %947 = vmatmul.mubr.bf16.gmra.mrb[0].mxu0 %v660
        %v948 = vpop.f32.mrb[0].mxu0
        %v949 = vadd.f32 0.0, %v948
        %v950 = vpop.f32.mrb[0].mxu0
        %v951 = vpop.f32.mrb[0].mxu0
        %v952 = vadd.f32 0.0, %v951
        %v953 = vpop.f32.mrb[0].mxu0
        %954 = vmatprep.mubr.bf16.mxu0 0
        %955 = vmatmul.mubr.bf16.gmra.mrb[0].mxu0 %v661
        %v956 = vpop.f32.mrb[0].mxu0
        %v957 = vadd.f32 0.0, %v956
        %v958 = vpop.f32.mrb[0].mxu0
        %v959 = vpop.f32.mrb[0].mxu0
        %v960 = vadd.f32 0.0, %v959
        %v961 = vpop.f32.mrb[0].mxu0
        %962 = vmatprep.mubr.bf16.mxu0 0
        %963 = vmatmul.mubr.bf16.gmra.mrb[0].mxu0 %v662
        %v964 = vpop.f32.mrb[0].mxu0
        %v965 = vadd.f32 0.0, %v964
        %v966 = vpop.f32.mrb[0].mxu0
        %v967 = vpop.f32.mrb[0].mxu0
        %v968 = vadd.f32 0.0, %v967
        %v969 = vpop.f32.mrb[0].mxu0
        %970 = vdwg.mxu0
        %971 = vmatprep.subr.bf16.mxu0 0
        %972 = vmatpush1.bf16.xpose.msra.mxu0 %v678
        %973 = vmatprep.subr.bf16.mxu0 0
        %974 = vmatpush1.bf16.xpose.msra.mxu0 0
        %975 = vmatprep.subr.bf16.mxu0 0
        %976 = vmatpush1.bf16.xpose.msra.mxu0 0
        %977 = vmatprep.subr.bf16.mxu0 0
        %978 = vmatpush1.bf16.xpose.msra.mxu0 0
        %979 = vmatprep.subr.bf16.mxu0 0
        %980 = vmatpush1.bf16.xpose.msra.mxu0 0
        %981 = vmatprep.subr.bf16.mxu0 0
        %982 = vmatpush1.bf16.xpose.msra.mxu0 0
        %983 = vmatprep.subr.bf16.mxu0 0
        %984 = vmatpush1.bf16.xpose.msra.mxu0 0
        %985 = vmatprep.subr.bf16.mxu0 0
        %986 = vmatpush1.bf16.xpose.msra.mxu0 0
        %987 = vmatprep.subr.bf16.mxu0 0
        %988 = vmatpush1.bf16.xpose.msra.mxu0 0
        %989 = vmatprep.subr.bf16.mxu0 0
        %990 = vmatpush1.bf16.xpose.msra.mxu0 0
        %991 = vmatprep.subr.bf16.mxu0 0
        %992 = vmatpush1.bf16.xpose.msra.mxu0 0
        %993 = vmatprep.subr.bf16.mxu0 0
        %994 = vmatpush1.bf16.xpose.msra.mxu0 0
        %995 = vmatprep.subr.bf16.mxu0 0
        %996 = vmatpush1.bf16.xpose.msra.mxu0 0
        %997 = vmatprep.subr.bf16.mxu0 0
        %998 = vmatpush1.bf16.xpose.msra.mxu0 0
        %999 = vmatprep.subr.bf16.mxu0 0
        %1000 = vmatpush1.bf16.xpose.msra.mxu0 0
        %1001 = vmatprep.subr.bf16.mxu0 0
        %1002 = vmatpush1.bf16.xpose.msra.mxu0 0
        %1003 = vmatprep.mubr.bf16.mxu0 0
        %1004 = vmatmul.mubr.bf16.gmra.mrb[0].mxu0 %v663
        %v1005 = vpop.f32.mrb[0].mxu0
        %v1006 = vadd.f32 0.0, %v1005
        %v1007 = vpop.f32.mrb[0].mxu0
        %v1008 = vpop.f32.mrb[0].mxu0
        %v1009 = vadd.f32 0.0, %v1008
        %v1010 = vpop.f32.mrb[0].mxu0
        %1011 = vmatprep.mubr.bf16.mxu0 0
        %1012 = vmatmul.mubr.bf16.gmra.mrb[0].mxu0 %v664
        %v1013 = vpop.f32.mrb[0].mxu0
        %v1014 = vadd.f32 0.0, %v1013
        %v1015 = vpop.f32.mrb[0].mxu0
        %v1016 = vpop.f32.mrb[0].mxu0
        %v1017 = vadd.f32 0.0, %v1016
        %v1018 = vpop.f32.mrb[0].mxu0
        %1019 = vmatprep.mubr.bf16.mxu0 0
        %1020 = vmatmul.mubr.bf16.gmra.mrb[0].mxu0 %v665
        %v1021 = vpop.f32.mrb[0].mxu0
        %v1022 = vadd.f32 0.0, %v1021
        %v1023 = vpop.f32.mrb[0].mxu0
        %v1024 = vpop.f32.mrb[0].mxu0
        %v1025 = vadd.f32 0.0, %v1024
        %v1026 = vpop.f32.mrb[0].mxu0
        %1027 = vmatprep.mubr.bf16.mxu0 0
        %1028 = vmatmul.mubr.bf16.gmra.mrb[0].mxu0 %v666
        %v1029 = vpop.f32.mrb[0].mxu0
        %v1030 = vadd.f32 0.0, %v1029
        %v1031 = vpop.f32.mrb[0].mxu0
        %v1032 = vpop.f32.mrb[0].mxu0
        %v1033 = vadd.f32 0.0, %v1032
        %v1034 = vpop.f32.mrb[0].mxu0
        %1035 = vmatprep.mubr.bf16.mxu0 0
        %1036 = vmatmul.mubr.bf16.gmra.mrb[0].mxu0 %v667
        %v1037 = vpop.f32.mrb[0].mxu0
        %v1038 = vadd.f32 0.0, %v1037
        %v1039 = vpop.f32.mrb[0].mxu0
        %v1040 = vpop.f32.mrb[0].mxu0
        %v1041 = vadd.f32 0.0, %v1040
        %v1042 = vpop.f32.mrb[0].mxu0
        %1043 = vmatprep.mubr.bf16.mxu0 0
        %1044 = vmatmul.mubr.bf16.gmra.mrb[0].mxu0 %v668
        %v1045 = vpop.f32.mrb[0].mxu0
        %v1046 = vadd.f32 0.0, %v1045
        %v1047 = vpop.f32.mrb[0].mxu0
        %v1048 = vpop.f32.mrb[0].mxu0
        %v1049 = vadd.f32 0.0, %v1048
        %v1050 = vpop.f32.mrb[0].mxu0
        %1051 = vmatprep.mubr.bf16.mxu0 0
        %1052 = vmatmul.mubr.bf16.gmra.mrb[0].mxu0 %v669
        %v1053 = vpop.f32.mrb[0].mxu0
        %v1054 = vadd.f32 0.0, %v1053
        %v1055 = vpop.f32.mrb[0].mxu0
        %v1056 = vpop.f32.mrb[0].mxu0
        %v1057 = vadd.f32 0.0, %v1056
        %v1058 = vpop.f32.mrb[0].mxu0
        %1059 = vmatprep.mubr.bf16.mxu0 0
        %1060 = vmatmul.mubr.bf16.gmra.mrb[0].mxu0 %v670
        %v1061 = vpop.f32.mrb[0].mxu0
        %v1062 = vadd.f32 0.0, %v1061
        %v1063 = vpop.f32.mrb[0].mxu0
        %v1064 = vpop.f32.mrb[0].mxu0
        %v1065 = vadd.f32 0.0, %v1064
        %v1066 = vpop.f32.mrb[0].mxu0
        %1067 = vdwg.mxu0
        %v1068 = vld [vmem:[%s2] sm:$0xff]
        %v1069 = vld [vmem:[%s2 + $0x8] sm:$0xff]
        %v1070 = vld [vmem:[%s2 + $0x10] sm:$0xff]
        %v1071 = vld [vmem:[%s2 + $0x18] sm:$0xff]
        %v1072 = vld [vmem:[%s2 + $0x20] sm:$0xff]
        %v1073 = vld [vmem:[%s2 + $0x28] sm:$0xff]
        %v1074 = vld [vmem:[%s2 + $0x30] sm:$0xff]
        %v1075 = vld [vmem:[%s2 + $0x38] sm:$0xff]
        %v1076 = vld [vmem:[%s2 + $0x40] sm:$0xff]
        %v1077 = vld [vmem:[%s2 + $0x48] sm:$0xff]
        %v1078 = vld [vmem:[%s2 + $0x50] sm:$0xff]
        %v1079 = vld [vmem:[%s2 + $0x58] sm:$0xff]
        %v1080 = vld [vmem:[%s2 + $0x60] sm:$0xff]
        %v1081 = vld [vmem:[%s2 + $0x68] sm:$0xff]
        %v1082 = vld [vmem:[%s2 + $0x70] sm:$0xff]
        %v1083 = vld [vmem:[%s2 + $0x78] sm:$0xff]
        %v1084 = vsel %vm334, %v715, 0.0
        %v1085 = vsel %vm334, %v812, 0.0
        %v1086 = vadd.f32 %v1084, %v1085
        %v1087 = vsel %vm334, %v909, 0.0
        %v1088 = vadd.f32 %v1086, %v1087
        %v1089 = vsel %vm334, %v1006, 0.0
        %v1090 = vadd.f32 %v1088, %v1089
        %v1091 = vsel %vm334, %v718, 0.0
        %v1092 = vsel %vm334, %v815, 0.0
        %v1093 = vadd.f32 %v1091, %v1092
        %v1094 = vsel %vm334, %v912, 0.0
        %v1095 = vadd.f32 %v1093, %v1094
        %v1096 = vsel %vm334, %v1009, 0.0
        %v1097 = vadd.f32 %v1095, %v1096
        %v1098 = vsel %vm334, %v723, 0.0
        %v1099 = vsel %vm334, %v820, 0.0
        %v1100 = vadd.f32 %v1098, %v1099
        %v1101 = vsel %vm334, %v917, 0.0
        %v1102 = vadd.f32 %v1100, %v1101
        %v1103 = vsel %vm334, %v1014, 0.0
        %v1104 = vadd.f32 %v1102, %v1103
        %v1105 = vsel %vm334, %v726, 0.0
        %v1106 = vsel %vm334, %v823, 0.0
        %v1107 = vadd.f32 %v1105, %v1106
        %v1108 = vsel %vm334, %v920, 0.0
        %v1109 = vadd.f32 %v1107, %v1108
        %v1110 = vsel %vm334, %v1017, 0.0
        %v1111 = vadd.f32 %v1109, %v1110
        %v1112 = vsel %vm334, %v731, 0.0
        %v1113 = vsel %vm334, %v828, 0.0
        %v1114 = vadd.f32 %v1112, %v1113
        %v1115 = vsel %vm334, %v925, 0.0
        %v1116 = vadd.f32 %v1114, %v1115
        %v1117 = vsel %vm334, %v1022, 0.0
        %v1118 = vadd.f32 %v1116, %v1117
        %v1119 = vsel %vm334, %v734, 0.0
        %v1120 = vsel %vm334, %v831, 0.0
        %v1121 = vadd.f32 %v1119, %v1120
        %v1122 = vsel %vm334, %v928, 0.0
        %v1123 = vadd.f32 %v1121, %v1122
        %v1124 = vsel %vm334, %v1025, 0.0
        %v1125 = vadd.f32 %v1123, %v1124
        %v1126 = vsel %vm334, %v739, 0.0
        %v1127 = vsel %vm334, %v836, 0.0
        %v1128 = vadd.f32 %v1126, %v1127
        %v1129 = vsel %vm334, %v933, 0.0
        %v1130 = vadd.f32 %v1128, %v1129
        %v1131 = vsel %vm334, %v1030, 0.0
        %v1132 = vadd.f32 %v1130, %v1131
        %v1133 = vsel %vm334, %v742, 0.0
        %v1134 = vsel %vm334, %v839, 0.0
        %v1135 = vadd.f32 %v1133, %v1134
        %v1136 = vsel %vm334, %v936, 0.0
        %v1137 = vadd.f32 %v1135, %v1136
        %v1138 = vsel %vm334, %v1033, 0.0
        %v1139 = vadd.f32 %v1137, %v1138
        %v1140 = vsel %vm334, %v747, 0.0
        %v1141 = vsel %vm334, %v844, 0.0
        %v1142 = vadd.f32 %v1140, %v1141
        %v1143 = vsel %vm334, %v941, 0.0
        %v1144 = vadd.f32 %v1142, %v1143
        %v1145 = vsel %vm334, %v1038, 0.0
        %v1146 = vadd.f32 %v1144, %v1145
        %v1147 = vsel %vm334, %v750, 0.0
        %v1148 = vsel %vm334, %v847, 0.0
        %v1149 = vadd.f32 %v1147, %v1148
        %v1150 = vsel %vm334, %v944, 0.0
        %v1151 = vadd.f32 %v1149, %v1150
        %v1152 = vsel %vm334, %v1041, 0.0
        %v1153 = vadd.f32 %v1151, %v1152
        %v1154 = vsel %vm334, %v755, 0.0
        %v1155 = vsel %vm334, %v852, 0.0
        %v1156 = vadd.f32 %v1154, %v1155
        %v1157 = vsel %vm334, %v949, 0.0
        %v1158 = vadd.f32 %v1156, %v1157
        %v1159 = vsel %vm334, %v1046, 0.0
        %v1160 = vadd.f32 %v1158, %v1159
        %v1161 = vsel %vm334, %v758, 0.0
        %v1162 = vsel %vm334, %v855, 0.0
        %v1163 = vadd.f32 %v1161, %v1162
        %v1164 = vsel %vm334, %v952, 0.0
        %v1165 = vadd.f32 %v1163, %v1164
        %v1166 = vsel %vm334, %v1049, 0.0
        %v1167 = vadd.f32 %v1165, %v1166
        %v1168 = vsel %vm334, %v763, 0.0
        %v1169 = vsel %vm334, %v860, 0.0
        %v1170 = vadd.f32 %v1168, %v1169
        %v1171 = vsel %vm334, %v957, 0.0
        %v1172 = vadd.f32 %v1170, %v1171
        %v1173 = vsel %vm334, %v1054, 0.0
        %v1174 = vadd.f32 %v1172, %v1173
        %v1175 = vsel %vm334, %v766, 0.0
        %v1176 = vsel %vm334, %v863, 0.0
        %v1177 = vadd.f32 %v1175, %v1176
        %v1178 = vsel %vm334, %v960, 0.0
        %v1179 = vadd.f32 %v1177, %v1178
        %v1180 = vsel %vm334, %v1057, 0.0
        %v1181 = vadd.f32 %v1179, %v1180
        %v1182 = vsel %vm334, %v771, 0.0
        %v1183 = vsel %vm334, %v868, 0.0
        %v1184 = vadd.f32 %v1182, %v1183
        %v1185 = vsel %vm334, %v965, 0.0
        %v1186 = vadd.f32 %v1184, %v1185
        %v1187 = vsel %vm334, %v1062, 0.0
        %v1188 = vadd.f32 %v1186, %v1187
        %v1189 = vsel %vm334, %v774, 0.0
        %v1190 = vsel %vm334, %v871, 0.0
        %v1191 = vadd.f32 %v1189, %v1190
        %v1192 = vsel %vm334, %v968, 0.0
        %v1193 = vadd.f32 %v1191, %v1192
        %v1194 = vsel %vm334, %v1065, 0.0
        %v1195 = vadd.f32 %v1193, %v1194
        %v1196 = vmul.f32 %v1068, %v1090
        %v1197 = vmul.f32 %v1069, %v1097
        %v1198 = vmul.f32 %v1070, %v1104
        %v1199 = vmul.f32 %v1071, %v1111
        %v1200 = vmul.f32 %v1072, %v1118
        %v1201 = vmul.f32 %v1073, %v1125
        %v1202 = vmul.f32 %v1074, %v1132
        %v1203 = vmul.f32 %v1075, %v1139
        %v1204 = vmul.f32 %v1076, %v1146
        %v1205 = vmul.f32 %v1077, %v1153
        %v1206 = vmul.f32 %v1078, %v1160
        %v1207 = vmul.f32 %v1079, %v1167
        %v1208 = vmul.f32 %v1080, %v1174
        %v1209 = vmul.f32 %v1081, %v1181
        %v1210 = vmul.f32 %v1082, %v1188
        %v1211 = vmul.f32 %v1083, %v1195
        %v1212 = vsel %vm334, %v1196, 0.0
        %v1213 = vsel %vm334, %v1197, 0.0
        %v1214 = vadd.f32 %v1212, %v1213
        %v1215 = vsel %vm334, %v1198, 0.0
        %v1216 = vadd.f32 %v1214, %v1215
        %v1217 = vsel %vm334, %v1199, 0.0
        %v1218 = vadd.f32 %v1216, %v1217
        %v1219 = vsel %vm334, %v1200, 0.0
        %v1220 = vadd.f32 %v1218, %v1219
        %v1221 = vsel %vm334, %v1201, 0.0
        %v1222 = vadd.f32 %v1220, %v1221
        %v1223 = vsel %vm334, %v1202, 0.0
        %v1224 = vadd.f32 %v1222, %v1223
        %v1225 = vsel %vm334, %v1203, 0.0
        %v1226 = vadd.f32 %v1224, %v1225
        %v1227 = vsel %vm334, %v1204, 0.0
        %v1228 = vadd.f32 %v1226, %v1227
        %v1229 = vsel %vm334, %v1205, 0.0
        %v1230 = vadd.f32 %v1228, %v1229
        %v1231 = vsel %vm334, %v1206, 0.0
        %v1232 = vadd.f32 %v1230, %v1231
        %v1233 = vsel %vm334, %v1207, 0.0
        %v1234 = vadd.f32 %v1232, %v1233
        %v1235 = vsel %vm334, %v1208, 0.0
        %v1236 = vadd.f32 %v1234, %v1235
        %v1237 = vsel %vm334, %v1209, 0.0
        %v1238 = vadd.f32 %v1236, %v1237
        %v1239 = vsel %vm334, %v1210, 0.0
        %v1240 = vadd.f32 %v1238, %v1239
        %v1241 = vsel %vm334, %v1211, 0.0
        %v1242 = vadd.f32 %v1240, %v1241
        %v1243 = vrot.slane %v1242, 4
        %v1244 = vadd.f32 %v1242, %v1243
        %v1245 = vrot.slane %v1244, 2
        %v1246 = vadd.f32 %v1244, %v1245
        %v1247 = vrot.slane %v1246, 1
        %v1248 = vadd.f32 %v1246, %v1247
        %vm1249 = vcmask 122880
        %1250 = vst.msk [vmem:[%s248] sm:$0x1] %vm1249, %v1248
        %s1251 = sand.u32 %s124, 1
        %s1252 = scalar_lea.sflag [#allocation4], %s1251
        %s1253 = sand.u32 %s124, 1
        %s1254 = scalar_lea.vmem [#allocation7], %s1253
        // Predicated region
        $region45: #{tpu_custom_call.1} parent=35 // pred_check
          %p1255 = pneg %p134
        $region46: #{tpu_custom_call.1} parent=35 // pred_check_branch
          %1257 = sbr.rel (%p1255) target = $region48
        $region47: #{tpu_custom_call.1} parent=35 // pred_region
          %s1259 = ssub.s32 16, 16
          %1260 = vsyncadd %s1252, %s1259
          %s1261 = smul.addr %s22, 16
          %s1262 = scalar_lea.hbm %s4, %s1261
          %s1264 = sshll.u32 %s1254, 4
          %s1265 = int_to_ptr.vmem [resolvable:$true] %s1264
          %1267 = dma.vmem_to_hbm [thread:$0]  %s1265, 16, %s1262, %s1252
        $region48: #{tpu_custom_call.1} parent=35 // pred_fallthru
          _
      $region36: #{tpu_custom_call.1} parent=5 // pred_fallthru
        _
      %p1268 = scmp.le.s32.totalorder 2, %s17
      // Predicated region
      $region49: #{tpu_custom_call.1} parent=5 // pred_check
        %p1269 = pneg %p1268
      $region50: #{tpu_custom_call.1} parent=5 // pred_check_branch
        %1271 = sbr.rel (%p1269) target = $region52
      $region51: #{tpu_custom_call.1} parent=5 // pred_region
        %s1272 = ssub.s32 %s17, 2
        // Predicated region
        $region53: #{tpu_custom_call.1} parent=51 // pred_check
          %p1273 = pneg %p140
        $region54: #{tpu_custom_call.1} parent=51 // pred_check_branch
          %1275 = sbr.rel (%p1273) target = $region56
        $region55: #{tpu_custom_call.1} parent=51 // pred_region
          %s1276 = sand.u32 %s125, 1
          %s1277 = scalar_lea.sflag [#allocation4], %s1276
          %s1278 = sand.u32 %s125, 1
          %s1279 = scalar_lea.vmem [#allocation7], %s1278
          %1280 = dma.done %s1277, 16
        $region56: #{tpu_custom_call.1} parent=51 // pred_fallthru
          _
      $region52: #{tpu_custom_call.1} parent=5 // pred_fallthru
        _
    $region6: #{tpu_custom_call.1} parent=1 // loop_footer
      %s21 = sadd.s32 1, %s17
    $region7: #{tpu_custom_call.1} parent=1 // loop_footer_branch
      %16 = sbr.rel target = $region3
    $region8: #{tpu_custom_call.1} parent=1 // loop_exit
      _
    %1281 = vsyncpa [#allocation3], 1
    %s1282 = scalar_lea.sflag [#allocation3], 1
    %1283 = vsyncpa %s1282, 1
    %1284 = vsyncpa [#allocation6], 1
    %1285 = vsyncpa [#allocation4], 1
    %s1286 = scalar_lea.sflag [#allocation4], 1
    %1287 = vsyncpa %s1286, 1

</llo_original>
